<compile_context>
chip_gen: v6e
topology: v6e:2x2x1
jax: 0.10.0
libtpu: 0.0.40
codegen_flags: <defaults>
</compile_context>

<pallas_src>
import functools
import inspect

import jax
import jax.numpy as jnp
from jax.experimental import pallas as pl
from jax.experimental.pallas import tpu as pltpu

_LANE = 128

try:
    _SUPPORTS_SINGLE_BUFFER = (
        hasattr(pl, "Buffered")
        and "pipeline_mode" in inspect.signature(pl.BlockSpec).parameters
    )
except (TypeError, ValueError):
    _SUPPORTS_SINGLE_BUFFER = False


def _round_up(x, m):
    return (x + m - 1) // m * m


def _cdiv(a, b):
    return (a + b - 1) // b


def _vmem_budget_bytes():
    """~80% of physical VMEM (headroom for compiler scratch / semaphores)."""
    phys = 64 * 1024 * 1024  # conservative default = v7x per-TensorCore VMEM
    try:
        phys = int(pltpu.get_tpu_info().vmem_capacity_bytes)
    except Exception:
        pass
    return int(phys * 0.8)


def _vmem_estimate(m_tile, x_itemsize, out_itemsize, padded_params, out_features,
                   single_buffer_weights):
    """Rough VMEM footprint: double-buffered act tiles + resident params + temps."""
    wb = 1 if single_buffer_weights else 2
    k_in = padded_params[0][0].shape[0]
    max_n = max(w.shape[1] for w, _ in padded_params)
    est = 2 * m_tile * k_in * x_itemsize                 # input tile (2 buffers)
    est += 2 * m_tile * out_features * out_itemsize      # output tile (2 buffers)
    est += wb * sum(w.size * w.dtype.itemsize + b.size * b.dtype.itemsize
                    for w, b in padded_params)           # resident params
    est += 3 * m_tile * max_n * 4                        # live f32 intermediates
    return int(est)


def _weight_spec(shape, single_buffer):
    if single_buffer:
        # Constant block index across the grid -> nothing to double-buffer.
        return pl.BlockSpec(shape, lambda i: (0, 0), pipeline_mode=pl.Buffered(1))
    return pl.BlockSpec(shape, lambda i: (0, 0))


def _mlp_kernel(*refs, num_linear, compute_dtype):
    """Fused MLP for one batch tile: x @ W0 + b0 -> ReLU -> ... -> @ W_last + b_last.

    refs = (x_ref, w0, b0, ..., w_{L-1}, b_{L-1}, o_ref).  Intermediates stay
    on-chip as values; accumulation is always f32 on the MXU.
    """
    x_ref = refs[0]
    o_ref = refs[-1]
    wb = refs[1:-1]

    h = x_ref[...]
    for i in range(num_linear):
        w_ref = wb[2 * i]
        b_ref = wb[2 * i + 1]
        lhs = h if h.dtype == compute_dtype else h.astype(compute_dtype)
        acc = jnp.dot(lhs, w_ref[...], preferred_element_type=jnp.float32)
        acc = acc + b_ref[...].astype(jnp.float32)   # (1, N) broadcasts over rows
        if i != num_linear - 1:
            acc = jnp.maximum(acc, 0.0)
        h = acc
    o_ref[...] = h.astype(o_ref.dtype)


def mlp_forward_pallas(x, padded_params, *, m_tile, out_features, compute_dtype,
                       out_dtype, vmem_limit_bytes, single_buffer_weights):
    """x: (M, K) unpadded; output: (M, out_features) unpadded. Ragged last tile OK."""
    m, k = x.shape
    grid_m = _cdiv(m, m_tile)
    num_linear = len(padded_params)

    in_specs = [pl.BlockSpec((m_tile, k), lambda i: (i, 0))]
    args = [x]
    for w, b in padded_params:
        in_specs.append(_weight_spec(w.shape, single_buffer_weights))
        in_specs.append(_weight_spec(b.shape, single_buffer_weights))
        args += [w, b]
    out_specs = pl.BlockSpec((m_tile, out_features), lambda i: (i, 0))

    flops = 2 * m * sum(w.shape[0] * w.shape[1] for w, _ in padded_params)
    bytes_accessed = x.size * x.dtype.itemsize
    bytes_accessed += m * out_features * jnp.dtype(out_dtype).itemsize
    bytes_accessed += sum(w.size * w.dtype.itemsize + b.size * b.dtype.itemsize
                          for w, b in padded_params)
    cost = pl.CostEstimate(flops=int(flops), transcendentals=0,
                           bytes_accessed=int(bytes_accessed))

    kernel = functools.partial(_mlp_kernel, num_linear=num_linear,
                               compute_dtype=compute_dtype)
    return pl.pallas_call(
        kernel,
        out_shape=jax.ShapeDtypeStruct((m, out_features), out_dtype),
        grid=(grid_m,),
        in_specs=in_specs,
        out_specs=out_specs,
        compiler_params=pltpu.CompilerParams(
            dimension_semantics=("parallel",),   # independent batch tiles
            vmem_limit_bytes=int(vmem_limit_bytes),
        ),
        cost_estimate=cost,
    )(*args)


class Projector:
    """JAX/Pallas port of the PyTorch Projector (Linear [-> ReLU -> Linear]*)."""

    def __init__(self, in_features, out_features, n_layers=0, n_hidden=128,
                 key=jax.random.PRNGKey(0), dtype=jnp.float32,
                 compute_dtype=None, m_tile_max=1024):
        self.in_features = in_features
        self.out_features = out_features
        self.n_layers = n_layers
        self.dtype = jnp.dtype(dtype)
        # f32 default matches the PyTorch module; bf16 recommended on v6e/v7x
        # when the consumer tolerates it (halves weight HBM/VMEM traffic).
        self.compute_dtype = jnp.dtype(compute_dtype) if compute_dtype else self.dtype
        self.m_tile_max = m_tile_max

        if n_layers > 0:
            dims = [(in_features, n_hidden)]
            dims += [(n_hidden, n_hidden)] * (n_layers - 1)
            dims.append((n_hidden, out_features))
        else:
            dims = [(in_features, out_features)]

        # Raw params — PyTorch nn.Linear default init range, stored transposed as
        # (in, out) so each layer is y = x @ W + b.
        self.params = []
        for fan_in, fan_out in dims:
            key, kw, kb = jax.random.split(key, 3)
            bound = 1.0 / (fan_in ** 0.5)
            w = jax.random.uniform(kw, (fan_in, fan_out), dtype=jnp.float32,
                                   minval=-bound, maxval=bound)
            b = jax.random.uniform(kb, (1, fan_out), dtype=jnp.float32,
                                   minval=-bound, maxval=bound)
            self.params.append((w, b))

        # Padded params: only INTERMEDIATE feature dims are zero-padded to 128 lanes
        # (exact: zero cols + zero bias -> ReLU(0)=0 -> zero rows feed zero rows).
        # The first layer's K and the last layer's N stay unpadded so x and the
        # output need no wrapper-side padding/slicing at all.
        self.padded_params = []
        num_linear = len(self.params)
        prev_n_pad = None
        for i, (w, b) in enumerate(self.params):
            k_raw, n_raw = w.shape
            k_pad = k_raw if i == 0 else prev_n_pad
            n_pad = n_raw if i == num_linear - 1 else _round_up(n_raw, _LANE)
            w_p = jnp.zeros((k_pad, n_pad), dtype=self.compute_dtype)
            w_p = w_p.at[:k_raw, :n_raw].set(w.astype(self.compute_dtype))
            b_p = jnp.zeros((1, n_pad), dtype=jnp.float32)
            b_p = b_p.at[:, :n_raw].set(b)
            self.padded_params.append((w_p, b_p))
            prev_n_pad = n_pad

    def __call__(self, x):
        M, K = x.shape
        assert K == self.in_features, (K, self.in_features)

        # Sublane multiple for the batch tile (8 for f32, 16 for bf16 arrays).
        min_item = min(jnp.dtype(x.dtype).itemsize, self.dtype.itemsize)
        sub = 8 * max(1, 4 // min_item)

        budget = _vmem_budget_bytes()
        single_buf = _SUPPORTS_SINGLE_BUFFER

        # >= 2 batch tiles whenever possible so the "parallel" axis shards across
        # both v7x TensorCores (one extra tiny grid step on v5e/v6e).
        m_tile = min(self.m_tile_max, _round_up(_cdiv(M, 2), sub))
        m_tile = max(m_tile, sub)

        def est(mt):
            return _vmem_estimate(mt, jnp.dtype(x.dtype).itemsize,
                                  self.dtype.itemsize, self.padded_params,
                                  self.out_features, single_buf)

        while est(m_tile) > budget and m_tile > sub:
            m_tile = max(sub, _round_up(m_tile // 2, sub))
        if est(m_tile) > budget:
            # TODO(synk): weight-streaming fallback (emit_pipeline over layers /
            # K-tiled grid) for parameter stacks that do not fit in VMEM.
            raise ValueError(
                f"Projector parameters (~{est(m_tile)} B) exceed the VMEM budget "
                f"({budget} B); reduce n_hidden/n_layers or add weight streaming.")

        vmem_limit = min(budget, max(est(m_tile) + (8 << 20), 16 << 20))

        run = functools.partial(
            mlp_forward_pallas, x, self.padded_params, m_tile=m_tile,
            out_features=self.out_features, compute_dtype=self.compute_dtype,
            out_dtype=self.dtype, vmem_limit_bytes=vmem_limit)
        if single_buf:
            try:
                return run(single_buffer_weights=True)
            except Exception:
                pass  # fall back if this build rejects pl.Buffered(1) here
        return run(single_buffer_weights=False)


def _reference_forward(params, x):
    h = x
    n = len(params)
    for i, (w, b) in enumerate(params):
        h = h @ w + b
        if i != n - 1:
            h = jnp.maximum(h, 0.0)
    return h


if __name__ == "__main__":
    key = jax.random.PRNGKey(0)

    # --- f32 check: batch=8, in=32, hidden=128, out=16, 2 hidden ReLU layers.
    key, kx, kp = jax.random.split(key, 3)
    x = jax.random.normal(kx, (8, 32), dtype=jnp.float32)
    proj = Projector(32, 16, n_layers=2, n_hidden=128, key=kp)
    out = jax.block_until_ready(proj(x))
    ref = _reference_forward(proj.params, x)
    assert out.shape == (8, 16), out.shape
    assert jnp.allclose(out, ref, atol=1e-4, rtol=1e-4), "mismatch (f32, 2 layers)"

    # --- multi-tile grid with a ragged last tile: batch=300, 3 hidden layers.
    key, kx2, kp2, kp3 = jax.random.split(key, 4)
    x2 = jax.random.normal(kx2, (300, 32), dtype=jnp.float32)
    proj2 = Projector(32, 64, n_layers=3, n_hidden=128, key=kp2)
    out2 = jax.block_until_ready(proj2(x2))
    ref2 = _reference_forward(proj2.params, x2)
    assert out2.shape == (300, 64), out2.shape
    assert jnp.allclose(out2, ref2, atol=1e-4, rtol=1e-4), "mismatch (ragged grid)"

    # --- small ragged batch not a multiple of 8: batch=13.
    key, kx3, kp4 = jax.random.split(key, 3)
    x3 = jax.random.normal(kx3, (13, 32), dtype=jnp.float32)
    proj3 = Projector(32, 16, n_layers=1, n_hidden=128, key=kp4)
    out3 = jax.block_until_ready(proj3(x3))
    ref3 = _reference_forward(proj3.params, x3)
    assert out3.shape == (13, 16), out3.shape
    assert jnp.allclose(out3, ref3, atol=1e-4, rtol=1e-4), "mismatch (ragged batch)"

    # --- n_layers=0 path: single Linear, no ReLU, both K and N unpadded.
    proj0 = Projector(32, 16, n_layers=0, key=kp3)
    out0 = jax.block_until_ready(proj0(x))
    ref0 = _reference_forward(proj0.params, x)
    assert out0.shape == (8, 16), out0.shape
    assert jnp.allclose(out0, ref0, atol=1e-4, rtol=1e-4), "mismatch (n_layers=0)"

    # --- bf16 compute path (f32 MXU accumulation; x/out stay f32, cast in-kernel).
    proj_bf16 = Projector(32, 16, n_layers=2, n_hidden=128, key=kp,
                          compute_dtype=jnp.bfloat16)
    out_bf16 = jax.block_until_ready(proj_bf16(x))
    assert out_bf16.shape == (8, 16), out_bf16.shape
    assert jnp.allclose(out_bf16.astype(jnp.float32), ref, atol=5e-2, rtol=5e-2), \
        "mismatch (bf16 compute)"

    print("KERNEL_OK")
</pallas_src>

<mosaic_0001>
module attributes {stable_mosaic.version = 11 : i64} {
  func.func @_mlp_kernel(%arg0: i32, %arg1: memref<8x32xf32, #tpu.memory_space<vmem>>, %arg2: memref<32x128xf32, #tpu.memory_space<vmem>>, %arg3: memref<1x128xf32, #tpu.memory_space<vmem>>, %arg4: memref<128x128xf32, #tpu.memory_space<vmem>>, %arg5: memref<1x128xf32, #tpu.memory_space<vmem>>, %arg6: memref<128x16xf32, #tpu.memory_space<vmem>>, %arg7: memref<1x16xf32, #tpu.memory_space<vmem>>, %arg8: memref<8x16xf32, #tpu.memory_space<vmem>>) attributes {dimension_semantics = [#tpu.dimension_semantics<parallel>], iteration_bounds = array<i64: 1>, scalar_prefetch = 0 : i64, scratch_operands = 0 : i64, tpu.core_type = #tpu.core_type<tc>, window_params = [{transform_indices = @transform_0, window_bounds = array<i64: 8, 32>}, {pipeline_mode = #tpu.pipeline_mode<synchronous>, transform_indices = @transform_1, window_bounds = array<i64: 32, 128>}, {pipeline_mode = #tpu.pipeline_mode<synchronous>, transform_indices = @transform_2, window_bounds = array<i64: 1, 128>}, {pipeline_mode = #tpu.pipeline_mode<synchronous>, transform_indices = @transform_3, window_bounds = array<i64: 128, 128>}, {pipeline_mode = #tpu.pipeline_mode<synchronous>, transform_indices = @transform_4, window_bounds = array<i64: 1, 128>}, {pipeline_mode = #tpu.pipeline_mode<synchronous>, transform_indices = @transform_5, window_bounds = array<i64: 128, 16>}, {pipeline_mode = #tpu.pipeline_mode<synchronous>, transform_indices = @transform_6, window_bounds = array<i64: 1, 16>}, {transform_indices = @transform_7, window_bounds = array<i64: 8, 16>}]} {
    %c0 = arith.constant 0 : index
    %c0_0 = arith.constant 0 : index
    %0 = vector.load %arg1[%c0, %c0_0] : memref<8x32xf32, #tpu.memory_space<vmem>>, vector<8x32xf32>
    %c0_1 = arith.constant 0 : index
    %c0_2 = arith.constant 0 : index
    %1 = vector.load %arg2[%c0_1, %c0_2] : memref<32x128xf32, #tpu.memory_space<vmem>>, vector<32x128xf32>
    %cst = arith.constant dense<0.000000e+00> : vector<8x128xf32>
    %2 = tpu.matmul %0, %1, %cst {dimension_numbers = #tpu.dot_dimension_numbers<[1], [0], [0], [1], [0, 0, 1, 1], [], []>} : vector<8x32xf32>, vector<32x128xf32>, vector<8x128xf32> -> vector<8x128xf32>
    %c0_3 = arith.constant 0 : index
    %c0_4 = arith.constant 0 : index
    %3 = vector.load %arg3[%c0_3, %c0_4] : memref<1x128xf32, #tpu.memory_space<vmem>>, vector<1x128xf32>
    %4 = vector.broadcast %3 : vector<1x128xf32> to vector<8x128xf32>
    %5 = arith.addf %2, %4 : vector<8x128xf32>
    %cst_5 = arith.constant 0.000000e+00 : f32
    %6 = vector.broadcast %cst_5 : f32 to vector<8x128xf32>
    %7 = arith.maximumf %5, %6 : vector<8x128xf32>
    %c0_6 = arith.constant 0 : index
    %c0_7 = arith.constant 0 : index
    %8 = vector.load %arg4[%c0_6, %c0_7] : memref<128x128xf32, #tpu.memory_space<vmem>>, vector<128x128xf32>
    %cst_8 = arith.constant dense<0.000000e+00> : vector<8x128xf32>
    %9 = tpu.matmul %7, %8, %cst_8 {dimension_numbers = #tpu.dot_dimension_numbers<[1], [0], [0], [1], [0, 0, 1, 1], [], []>} : vector<8x128xf32>, vector<128x128xf32>, vector<8x128xf32> -> vector<8x128xf32>
    %c0_9 = arith.constant 0 : index
    %c0_10 = arith.constant 0 : index
    %10 = vector.load %arg5[%c0_9, %c0_10] : memref<1x128xf32, #tpu.memory_space<vmem>>, vector<1x128xf32>
    %11 = vector.broadcast %10 : vector<1x128xf32> to vector<8x128xf32>
    %12 = arith.addf %9, %11 : vector<8x128xf32>
    %cst_11 = arith.constant 0.000000e+00 : f32
    %13 = vector.broadcast %cst_11 : f32 to vector<8x128xf32>
    %14 = arith.maximumf %12, %13 : vector<8x128xf32>
    %c0_12 = arith.constant 0 : index
    %c0_13 = arith.constant 0 : index
    %15 = vector.load %arg6[%c0_12, %c0_13] : memref<128x16xf32, #tpu.memory_space<vmem>>, vector<128x16xf32>
    %cst_14 = arith.constant dense<0.000000e+00> : vector<8x16xf32>
    %16 = tpu.matmul %14, %15, %cst_14 {dimension_numbers = #tpu.dot_dimension_numbers<[1], [0], [0], [1], [0, 0, 1, 1], [], []>} : vector<8x128xf32>, vector<128x16xf32>, vector<8x16xf32> -> vector<8x16xf32>
    %c0_15 = arith.constant 0 : index
    %c0_16 = arith.constant 0 : index
    %17 = vector.load %arg7[%c0_15, %c0_16] : memref<1x16xf32, #tpu.memory_space<vmem>>, vector<1x16xf32>
    %18 = vector.broadcast %17 : vector<1x16xf32> to vector<8x16xf32>
    %19 = arith.addf %16, %18 : vector<8x16xf32>
    %c0_17 = arith.constant 0 : index
    %c0_18 = arith.constant 0 : index
    %20 = vector.load %arg8[%c0_17, %c0_18] : memref<8x16xf32, #tpu.memory_space<vmem>>, vector<8x16xf32>
    tpu.vector_store %arg8[%c0_17, %c0_18], %19 {strides = array<i32>} : memref<8x16xf32, #tpu.memory_space<vmem>>, vector<8x16xf32>,
    return
  }
  func.func @transform_0(%arg0: i32) -> (i32, i32) {
    %c0_i32 = arith.constant 0 : i32
    %c0_i32_0 = arith.constant 0 : i32
    return %arg0, %c0_i32 : i32, i32
  }
  func.func @transform_1(%arg0: i32) -> (i32, i32) {
    %c0_i32 = arith.constant 0 : i32
    %c0_i32_0 = arith.constant 0 : i32
    %c0_i32_1 = arith.constant 0 : i32
    return %c0_i32, %c0_i32_0 : i32, i32
  }
  func.func @transform_2(%arg0: i32) -> (i32, i32) {
    %c0_i32 = arith.constant 0 : i32
    %c0_i32_0 = arith.constant 0 : i32
    %c0_i32_1 = arith.constant 0 : i32
    return %c0_i32, %c0_i32_0 : i32, i32
  }
  func.func @transform_3(%arg0: i32) -> (i32, i32) {
    %c0_i32 = arith.constant 0 : i32
    %c0_i32_0 = arith.constant 0 : i32
    %c0_i32_1 = arith.constant 0 : i32
    return %c0_i32, %c0_i32_0 : i32, i32
  }
  func.func @transform_4(%arg0: i32) -> (i32, i32) {
    %c0_i32 = arith.constant 0 : i32
    %c0_i32_0 = arith.constant 0 : i32
    %c0_i32_1 = arith.constant 0 : i32
    return %c0_i32, %c0_i32_0 : i32, i32
  }
  func.func @transform_5(%arg0: i32) -> (i32, i32) {
    %c0_i32 = arith.constant 0 : i32
    %c0_i32_0 = arith.constant 0 : i32
    %c0_i32_1 = arith.constant 0 : i32
    return %c0_i32, %c0_i32_0 : i32, i32
  }
  func.func @transform_6(%arg0: i32) -> (i32, i32) {
    %c0_i32 = arith.constant 0 : i32
    %c0_i32_0 = arith.constant 0 : i32
    %c0_i32_1 = arith.constant 0 : i32
    return %c0_i32, %c0_i32_0 : i32, i32
  }
  func.func @transform_7(%arg0: i32) -> (i32, i32) {
    %c0_i32 = arith.constant 0 : i32
    %c0_i32_0 = arith.constant 0 : i32
    return %arg0, %c0_i32 : i32, i32
  }
}

module attributes {stable_mosaic.version = 11 : i64} {
  func.func @_mlp_kernel(%arg0: i32, %arg1: memref<8x32xf32, #tpu.memory_space<vmem>>, %arg2: memref<32x128xf32, #tpu.memory_space<vmem>>, %arg3: memref<1x128xf32, #tpu.memory_space<vmem>>, %arg4: memref<128x128xf32, #tpu.memory_space<vmem>>, %arg5: memref<1x128xf32, #tpu.memory_space<vmem>>, %arg6: memref<128x16xf32, #tpu.memory_space<vmem>>, %arg7: memref<1x16xf32, #tpu.memory_space<vmem>>, %arg8: memref<8x16xf32, #tpu.memory_space<vmem>>) attributes {dimension_semantics = [#tpu.dimension_semantics<parallel>], iteration_bounds = array<i64: 1>, scalar_prefetch = 0 : i64, scratch_operands = 0 : i64, tpu.core_type = #tpu.core_type<tc>, window_params = [{transform_indices = @transform_0, window_bounds = array<i64: 8, 32>}, {pipeline_mode = #tpu.pipeline_mode<synchronous>, transform_indices = @transform_1, window_bounds = array<i64: 32, 128>}, {pipeline_mode = #tpu.pipeline_mode<synchronous>, transform_indices = @transform_2, window_bounds = array<i64: 1, 128>}, {pipeline_mode = #tpu.pipeline_mode<synchronous>, transform_indices = @transform_3, window_bounds = array<i64: 128, 128>}, {pipeline_mode = #tpu.pipeline_mode<synchronous>, transform_indices = @transform_4, window_bounds = array<i64: 1, 128>}, {pipeline_mode = #tpu.pipeline_mode<synchronous>, transform_indices = @transform_5, window_bounds = array<i64: 128, 16>}, {pipeline_mode = #tpu.pipeline_mode<synchronous>, transform_indices = @transform_6, window_bounds = array<i64: 1, 16>}, {transform_indices = @transform_7, window_bounds = array<i64: 8, 16>}]} {
    %c0 = arith.constant 0 : index
    %c0_0 = arith.constant 0 : index
    %0 = vector.load %arg1[%c0, %c0_0] : memref<8x32xf32, #tpu.memory_space<vmem>>, vector<8x32xf32>
    %c0_1 = arith.constant 0 : index
    %c0_2 = arith.constant 0 : index
    %1 = vector.load %arg2[%c0_1, %c0_2] : memref<32x128xf32, #tpu.memory_space<vmem>>, vector<32x128xf32>
    %cst = arith.constant dense<0.000000e+00> : vector<8x128xf32>
    %2 = tpu.matmul %0, %1, %cst {dimension_numbers = #tpu.dot_dimension_numbers<[1], [0], [0], [1], [0, 0, 1, 1], [], []>} : vector<8x32xf32>, vector<32x128xf32>, vector<8x128xf32> -> vector<8x128xf32>
    %c0_3 = arith.constant 0 : index
    %c0_4 = arith.constant 0 : index
    %3 = vector.load %arg3[%c0_3, %c0_4] : memref<1x128xf32, #tpu.memory_space<vmem>>, vector<1x128xf32>
    %4 = vector.broadcast %3 : vector<1x128xf32> to vector<8x128xf32>
    %5 = arith.addf %2, %4 : vector<8x128xf32>
    %cst_5 = arith.constant 0.000000e+00 : f32
    %6 = vector.broadcast %cst_5 : f32 to vector<8x128xf32>
    %7 = arith.maximumf %5, %6 : vector<8x128xf32>
    %c0_6 = arith.constant 0 : index
    %c0_7 = arith.constant 0 : index
    %8 = vector.load %arg4[%c0_6, %c0_7] : memref<128x128xf32, #tpu.memory_space<vmem>>, vector<128x128xf32>
    %cst_8 = arith.constant dense<0.000000e+00> : vector<8x128xf32>
    %9 = tpu.matmul %7, %8, %cst_8 {dimension_numbers = #tpu.dot_dimension_numbers<[1], [0], [0], [1], [0, 0, 1, 1], [], []>} : vector<8x128xf32>, vector<128x128xf32>, vector<8x128xf32> -> vector<8x128xf32>
    %c0_9 = arith.constant 0 : index
    %c0_10 = arith.constant 0 : index
    %10 = vector.load %arg5[%c0_9, %c0_10] : memref<1x128xf32, #tpu.memory_space<vmem>>, vector<1x128xf32>
    %11 = vector.broadcast %10 : vector<1x128xf32> to vector<8x128xf32>
    %12 = arith.addf %9, %11 : vector<8x128xf32>
    %cst_11 = arith.constant 0.000000e+00 : f32
    %13 = vector.broadcast %cst_11 : f32 to vector<8x128xf32>
    %14 = arith.maximumf %12, %13 : vector<8x128xf32>
    %c0_12 = arith.constant 0 : index
    %c0_13 = arith.constant 0 : index
    %15 = vector.load %arg6[%c0_12, %c0_13] : memref<128x16xf32, #tpu.memory_space<vmem>>, vector<128x16xf32>
    %cst_14 = arith.constant dense<0.000000e+00> : vector<8x16xf32>
    %16 = tpu.matmul %14, %15, %cst_14 {dimension_numbers = #tpu.dot_dimension_numbers<[1], [0], [0], [1], [0, 0, 1, 1], [], []>} : vector<8x128xf32>, vector<128x16xf32>, vector<8x16xf32> -> vector<8x16xf32>
    %c0_15 = arith.constant 0 : index
    %c0_16 = arith.constant 0 : index
    %17 = vector.load %arg7[%c0_15, %c0_16] : memref<1x16xf32, #tpu.memory_space<vmem>>, vector<1x16xf32>
    %18 = vector.broadcast %17 : vector<1x16xf32> to vector<8x16xf32>
    %19 = arith.addf %16, %18 : vector<8x16xf32>
    %c0_17 = arith.constant 0 : index
    %c0_18 = arith.constant 0 : index
    %20 = vector.load %arg8[%c0_17, %c0_18] : memref<8x16xf32, #tpu.memory_space<vmem>>, vector<8x16xf32>
    tpu.vector_store %arg8[%c0_17, %c0_18], %19 {strides = array<i32>} : memref<8x16xf32, #tpu.memory_space<vmem>>, vector<8x16xf32>,
    return
  }
  func.func @transform_0(%arg0: i32) -> (i32, i32) {
    %c0_i32 = arith.constant 0 : i32
    %c0_i32_0 = arith.constant 0 : i32
    return %arg0, %c0_i32 : i32, i32
  }
  func.func @transform_1(%arg0: i32) -> (i32, i32) {
    %c0_i32 = arith.constant 0 : i32
    %c0_i32_0 = arith.constant 0 : i32
    %c0_i32_1 = arith.constant 0 : i32
    return %c0_i32, %c0_i32_0 : i32, i32
  }
  func.func @transform_2(%arg0: i32) -> (i32, i32) {
    %c0_i32 = arith.constant 0 : i32
    %c0_i32_0 = arith.constant 0 : i32
    %c0_i32_1 = arith.constant 0 : i32
    return %c0_i32, %c0_i32_0 : i32, i32
  }
  func.func @transform_3(%arg0: i32) -> (i32, i32) {
    %c0_i32 = arith.constant 0 : i32
    %c0_i32_0 = arith.constant 0 : i32
    %c0_i32_1 = arith.constant 0 : i32
    return %c0_i32, %c0_i32_0 : i32, i32
  }
  func.func @transform_4(%arg0: i32) -> (i32, i32) {
    %c0_i32 = arith.constant 0 : i32
    %c0_i32_0 = arith.constant 0 : i32
    %c0_i32_1 = arith.constant 0 : i32
    return %c0_i32, %c0_i32_0 : i32, i32
  }
  func.func @transform_5(%arg0: i32) -> (i32, i32) {
    %c0_i32 = arith.constant 0 : i32
    %c0_i32_0 = arith.constant 0 : i32
    %c0_i32_1 = arith.constant 0 : i32
    return %c0_i32, %c0_i32_0 : i32, i32
  }
  func.func @transform_6(%arg0: i32) -> (i32, i32) {
    %c0_i32 = arith.constant 0 : i32
    %c0_i32_0 = arith.constant 0 : i32
    %c0_i32_1 = arith.constant 0 : i32
    return %c0_i32, %c0_i32_0 : i32, i32
  }
  func.func @transform_7(%arg0: i32) -> (i32, i32) {
    %c0_i32 = arith.constant 0 : i32
    %c0_i32_0 = arith.constant 0 : i32
    return %arg0, %c0_i32 : i32, i32
  }
}

</mosaic_0001>

<llo_original>
// kernel: tpu_custom_call.1
$region0: #{tpu_custom_call.1}
  #allocation0 [shape = 'u32[]', space=smem, size = 0x4, offset = 0x4, fixed_abs, tag = 'smem constant byte address 0x4 - core index']
  #allocation1 [shape = 'u32[144,128]{1,0:T(1,128)}', space=vmem, size = 0x12000, scoped, tag = 'internal scratch']
  %s0 = inlined_call_operand.vmem [shape: f32[8,32], index: 0, kind: input, shape index: {}]
  %s1 = inlined_call_operand.hbm [shape: f32[32,128], index: 1, kind: input, shape index: {}]
  %s2 = inlined_call_operand.vmem [shape: f32[1,128], index: 2, kind: input, shape index: {}]
  %s3 = inlined_call_operand.vmem [shape: f32[128,128], index: 3, kind: input, shape index: {}]
  %s4 = inlined_call_operand.vmem [shape: f32[1,128], index: 4, kind: input, shape index: {}]
  %s5 = inlined_call_operand.vmem [shape: f32[128,16], index: 5, kind: input, shape index: {}]
  %s6 = inlined_call_operand.vmem [shape: f32[1,16], index: 6, kind: input, shape index: {}]
  %s7 = inlined_call_operand.hbm [shape: f32[8,16], index: 7, kind: output, shape index: {}]
  %s8 = sld [smem:[#allocation0]]
  $region42: #{tpu_custom_call.1} parent=0
    _
  %s10 = ssub.s32 1, %s8
  %s11 = scalar_select 0, %s10, %s8
  $region1: #{tpu_custom_call.1} parent=0
    #allocation2 [shape = 'u8[16384]{0}', space=vmem, size = 0x4000, scoped, tag = 'input window, operand 1, single buffered']
    #allocation3 [shape = 's32[1]{0}', space=sflag, size = 0x4, scoped, tag = 'scoped memory for tpu_custom_call.1']
    #allocation4 [shape = 's32[1]{0}', space=sflag, size = 0x4, scoped, tag = 'scoped memory for tpu_custom_call.1']
    #allocation5 [shape = 'u8[4096]{0}', space=vmem, size = 0x1000, scoped, tag = 'output window, operand 0, single buffered']
    %12 = vsyncpa [#allocation3], 0
    %13 = vsyncpa [#allocation4], 0
    // Predicated region
    $region2: #{tpu_custom_call.1} parent=1 // pred_check
      _
    $region3: #{tpu_custom_call.1} parent=1 // pred_check_branch
      %15 = sbr.rel (0) target = $region5
    $region4: #{tpu_custom_call.1} parent=1 // pred_region
      _
    $region5: #{tpu_custom_call.1} parent=1 // pred_fallthru
      _
    // Predicated region
    $region6: #{tpu_custom_call.1} parent=1 // pred_check
      _
    $region7: #{tpu_custom_call.1} parent=1 // pred_check_branch
      %17 = sbr.rel (0) target = $region9
    $region8: #{tpu_custom_call.1} parent=1 // pred_region
      %s19 = ssub.s32 512, 512
      %20 = vsyncadd [#allocation3], %s19
      %s21 = sshll.u32 [#allocation2], 4
      %s22 = int_to_ptr.vmem [resolvable:$true] %s21
      %27 = dma.hbm_to_vmem [thread:$0]  %s1, 512, %s22, [#allocation3], 128, 128, 8
    $region9: #{tpu_custom_call.1} parent=1 // pred_fallthru
      _
    // Predicated region
    $region10: #{tpu_custom_call.1} parent=1 // pred_check
      _
    $region11: #{tpu_custom_call.1} parent=1 // pred_check_branch
      %29 = sbr.rel (0) target = $region13
    $region12: #{tpu_custom_call.1} parent=1 // pred_region
      _
    $region13: #{tpu_custom_call.1} parent=1 // pred_fallthru
      _
    // Predicated region
    $region14: #{tpu_custom_call.1} parent=1 // pred_check
      _
    $region15: #{tpu_custom_call.1} parent=1 // pred_check_branch
      %31 = sbr.rel (0) target = $region17
    $region16: #{tpu_custom_call.1} parent=1 // pred_region
      _
    $region17: #{tpu_custom_call.1} parent=1 // pred_fallthru
      _
    // Predicated region
    $region18: #{tpu_custom_call.1} parent=1 // pred_check
      _
    $region19: #{tpu_custom_call.1} parent=1 // pred_check_branch
      %33 = sbr.rel (0) target = $region21
    $region20: #{tpu_custom_call.1} parent=1 // pred_region
      _
    $region21: #{tpu_custom_call.1} parent=1 // pred_fallthru
      _
    // Predicated region
    $region22: #{tpu_custom_call.1} parent=1 // pred_check
      _
    $region23: #{tpu_custom_call.1} parent=1 // pred_check_branch
      %35 = sbr.rel (0) target = $region25
    $region24: #{tpu_custom_call.1} parent=1 // pred_region
      _
    $region25: #{tpu_custom_call.1} parent=1 // pred_fallthru
      _
    // Predicated region
    $region26: #{tpu_custom_call.1} parent=1 // pred_check
      _
    $region27: #{tpu_custom_call.1} parent=1 // pred_check_branch
      %37 = sbr.rel (0) target = $region29
    $region28: #{tpu_custom_call.1} parent=1 // pred_region
      _
    $region29: #{tpu_custom_call.1} parent=1 // pred_fallthru
      _
    // Predicated region
    $region30: #{tpu_custom_call.1} parent=1 // pred_check
      _
    $region31: #{tpu_custom_call.1} parent=1 // pred_check_branch
      %39 = sbr.rel (0) target = $region33
    $region32: #{tpu_custom_call.1} parent=1 // pred_region
      %40 = dma.done [#allocation3], 512
    $region33: #{tpu_custom_call.1} parent=1 // pred_fallthru
      _
    %v41 = vld [vmem:[%s0] sm:$0xff]
    %v42 = vld [vmem:[#allocation2] sm:$0xff]
    %v43 = vld [vmem:[#allocation2 + $0x8] sm:$0xff]
    %v44 = vld [vmem:[#allocation2 + $0x10] sm:$0xff]
    %v45 = vld [vmem:[#allocation2 + $0x18] sm:$0xff]
    %v46 = vld [vmem:[%s2] sm:$0x1]
    %v48 = vlaneseq
    %v49 = vshrl.u32 %v48, 7
    %v50 = vsub.s32 0, %v49
    %v51 = vrot.slane %v46, %v50
    %vm53 = vcmask 261120
    %v55 = vsel %vm53, %v41, 0
    %57 = vmatprep.subr.mxu0 0.0
    %58 = vmatpush1.msra.mxu0 0.0
    %59 = vmatprep.subr.mxu0 0.0
    %60 = vmatpush1.msra.mxu0 0.0
    %61 = vmatprep.subr.mxu0 0.0
    %62 = vmatpush1.msra.mxu0 0.0
    %63 = vmatprep.subr.mxu0 0.0
    %64 = vmatpush1.msra.mxu0 0.0
    %65 = vmatprep.subr.mxu0 0.0
    %66 = vmatpush1.msra.mxu0 0.0
    %67 = vmatprep.subr.mxu0 0.0
    %68 = vmatpush1.msra.mxu0 0.0
    %69 = vmatprep.subr.mxu0 0.0
    %70 = vmatpush1.msra.mxu0 0.0
    %71 = vmatprep.subr.mxu0 0.0
    %72 = vmatpush1.msra.mxu0 0.0
    %73 = vmatprep.subr.mxu0 0.0
    %74 = vmatpush1.msra.mxu0 0.0
    %75 = vmatprep.subr.mxu0 0.0
    %76 = vmatpush1.msra.mxu0 0.0
    %77 = vmatprep.subr.mxu0 0.0
    %78 = vmatpush1.msra.mxu0 0.0
    %79 = vmatprep.subr.mxu0 0.0
    %80 = vmatpush1.msra.mxu0 0.0
    %81 = vmatprep.subr.mxu0 0.0
    %82 = vmatpush1.msra.mxu0 %v45
    %83 = vmatprep.subr.mxu0 0.0
    %84 = vmatpush1.msra.mxu0 %v44
    %85 = vmatprep.subr.mxu0 0.0
    %86 = vmatpush1.msra.mxu0 %v43
    %87 = vmatprep.subr.mxu0 0.0
    %88 = vmatpush1.msra.mxu0 %v42
    %89 = vmatprep.subr.mxu0 0.0
    %90 = vmatpush2.msra.mxu0 0.0
    %91 = vmatprep.subr.mxu0 0.0
    %92 = vmatpush2.msra.mxu0 0.0
    %93 = vmatprep.subr.mxu0 0.0
    %94 = vmatpush2.msra.mxu0 0.0
    %95 = vmatprep.subr.mxu0 0.0
    %96 = vmatpush2.msra.mxu0 0.0
    %97 = vmatprep.subr.mxu0 0.0
    %98 = vmatpush2.msra.mxu0 0.0
    %99 = vmatprep.subr.mxu0 0.0
    %100 = vmatpush2.msra.mxu0 0.0
    %101 = vmatprep.subr.mxu0 0.0
    %102 = vmatpush2.msra.mxu0 0.0
    %103 = vmatprep.subr.mxu0 0.0
    %104 = vmatpush2.msra.mxu0 0.0
    %105 = vmatprep.subr.mxu0 0.0
    %106 = vmatpush2.msra.mxu0 0.0
    %107 = vmatprep.subr.mxu0 0.0
    %108 = vmatpush2.msra.mxu0 0.0
    %109 = vmatprep.subr.mxu0 0.0
    %110 = vmatpush2.msra.mxu0 0.0
    %111 = vmatprep.subr.mxu0 0.0
    %112 = vmatpush2.msra.mxu0 0.0
    %113 = vmatprep.subr.mxu0 0.0
    %114 = vmatpush2.msra.mxu0 0.0
    %115 = vmatprep.subr.mxu0 0.0
    %116 = vmatpush2.msra.mxu0 0.0
    %117 = vmatprep.subr.mxu0 0.0
    %118 = vmatpush2.msra.mxu0 0.0
    %119 = vmatprep.subr.mxu0 0.0
    %120 = vmatpush2.msra.mxu0 0.0
    %121 = vmatprep.mubr.f32.mxu0 0.0
    %122 = vmatmul.mubr.f32.gmra.mxu0 %v55
    %v123 = vpop.f32.mrf.mxu0
    %v124 = vadd.f32 %v51, %v123
    %v125 = vpop.f32.mrf.mxu0
    %126 = vdwg.mxu0
    %v127 = vmax.f32 %v124, 0.0
    %v128 = vld [vmem:[%s3] sm:$0xff]
    %v129 = vld [vmem:[%s3 + $0x8] sm:$0xff]
    %v130 = vld [vmem:[%s3 + $0x10] sm:$0xff]
    %v131 = vld [vmem:[%s3 + $0x18] sm:$0xff]
    %v132 = vld [vmem:[%s3 + $0x20] sm:$0xff]
    %v133 = vld [vmem:[%s3 + $0x28] sm:$0xff]
    %v134 = vld [vmem:[%s3 + $0x30] sm:$0xff]
    %v135 = vld [vmem:[%s3 + $0x38] sm:$0xff]
    %v136 = vld [vmem:[%s3 + $0x40] sm:$0xff]
    %v137 = vld [vmem:[%s3 + $0x48] sm:$0xff]
    %v138 = vld [vmem:[%s3 + $0x50] sm:$0xff]
    %v139 = vld [vmem:[%s3 + $0x58] sm:$0xff]
    %v140 = vld [vmem:[%s3 + $0x60] sm:$0xff]
    %v141 = vld [vmem:[%s3 + $0x68] sm:$0xff]
    %v142 = vld [vmem:[%s3 + $0x70] sm:$0xff]
    %v143 = vld [vmem:[%s3 + $0x78] sm:$0xff]
    %v144 = vld [vmem:[%s4] sm:$0x1]
    %v146 = vlaneseq
    %v147 = vshrl.u32 %v146, 7
    %v148 = vsub.s32 0, %v147
    %v149 = vrot.slane %v144, %v148
    %151 = vmatprep.subr.mxu0 0.0
    %152 = vmatpush1.msra.mxu0 %v143
    %153 = vmatprep.subr.mxu0 0.0
    %154 = vmatpush1.msra.mxu0 %v142
    %155 = vmatprep.subr.mxu0 0.0
    %156 = vmatpush1.msra.mxu0 %v141
    %157 = vmatprep.subr.mxu0 0.0
    %158 = vmatpush1.msra.mxu0 %v140
    %159 = vmatprep.subr.mxu0 0.0
    %160 = vmatpush1.msra.mxu0 %v139
    %161 = vmatprep.subr.mxu0 0.0
    %162 = vmatpush1.msra.mxu0 %v138
    %163 = vmatprep.subr.mxu0 0.0
    %164 = vmatpush1.msra.mxu0 %v137
    %165 = vmatprep.subr.mxu0 0.0
    %166 = vmatpush1.msra.mxu0 %v136
    %167 = vmatprep.subr.mxu0 0.0
    %168 = vmatpush1.msra.mxu0 %v135
    %169 = vmatprep.subr.mxu0 0.0
    %170 = vmatpush1.msra.mxu0 %v134
    %171 = vmatprep.subr.mxu0 0.0
    %172 = vmatpush1.msra.mxu0 %v133
    %173 = vmatprep.subr.mxu0 0.0
    %174 = vmatpush1.msra.mxu0 %v132
    %175 = vmatprep.subr.mxu0 0.0
    %176 = vmatpush1.msra.mxu0 %v131
    %177 = vmatprep.subr.mxu0 0.0
    %178 = vmatpush1.msra.mxu0 %v130
    %179 = vmatprep.subr.mxu0 0.0
    %180 = vmatpush1.msra.mxu0 %v129
    %181 = vmatprep.subr.mxu0 0.0
    %182 = vmatpush1.msra.mxu0 %v128
    %183 = vmatprep.subr.mxu0 0.0
    %184 = vmatpush2.msra.mxu0 0.0
    %185 = vmatprep.subr.mxu0 0.0
    %186 = vmatpush2.msra.mxu0 0.0
    %187 = vmatprep.subr.mxu0 0.0
    %188 = vmatpush2.msra.mxu0 0.0
    %189 = vmatprep.subr.mxu0 0.0
    %190 = vmatpush2.msra.mxu0 0.0
    %191 = vmatprep.subr.mxu0 0.0
    %192 = vmatpush2.msra.mxu0 0.0
    %193 = vmatprep.subr.mxu0 0.0
    %194 = vmatpush2.msra.mxu0 0.0
    %195 = vmatprep.subr.mxu0 0.0
    %196 = vmatpush2.msra.mxu0 0.0
    %197 = vmatprep.subr.mxu0 0.0
    %198 = vmatpush2.msra.mxu0 0.0
    %199 = vmatprep.subr.mxu0 0.0
    %200 = vmatpush2.msra.mxu0 0.0
    %201 = vmatprep.subr.mxu0 0.0
    %202 = vmatpush2.msra.mxu0 0.0
    %203 = vmatprep.subr.mxu0 0.0
    %204 = vmatpush2.msra.mxu0 0.0
    %205 = vmatprep.subr.mxu0 0.0
    %206 = vmatpush2.msra.mxu0 0.0
    %207 = vmatprep.subr.mxu0 0.0
    %208 = vmatpush2.msra.mxu0 0.0
    %209 = vmatprep.subr.mxu0 0.0
    %210 = vmatpush2.msra.mxu0 0.0
    %211 = vmatprep.subr.mxu0 0.0
    %212 = vmatpush2.msra.mxu0 0.0
    %213 = vmatprep.subr.mxu0 0.0
    %214 = vmatpush2.msra.mxu0 0.0
    %215 = vmatprep.mubr.f32.mxu0 0.0
    %216 = vmatmul.mubr.f32.gmra.mxu0 %v127
    %v217 = vpop.f32.mrf.mxu0
    %v218 = vadd.f32 %v149, %v217
    %v219 = vpop.f32.mrf.mxu0
    %220 = vdwg.mxu0
    %v221 = vmax.f32 %v218, 0.0
    %v222 = vld [vmem:[%s5] sm:$0xff]
    %v223 = vld [vmem:[%s5 + $0x8] sm:$0xff]
    %v224 = vld [vmem:[%s5 + $0x10] sm:$0xff]
    %v225 = vld [vmem:[%s5 + $0x18] sm:$0xff]
    %v226 = vld [vmem:[%s5 + $0x20] sm:$0xff]
    %v227 = vld [vmem:[%s5 + $0x28] sm:$0xff]
    %v228 = vld [vmem:[%s5 + $0x30] sm:$0xff]
    %v229 = vld [vmem:[%s5 + $0x38] sm:$0xff]
    %v230 = vld [vmem:[%s5 + $0x40] sm:$0xff]
    %v231 = vld [vmem:[%s5 + $0x48] sm:$0xff]
    %v232 = vld [vmem:[%s5 + $0x50] sm:$0xff]
    %v233 = vld [vmem:[%s5 + $0x58] sm:$0xff]
    %v234 = vld [vmem:[%s5 + $0x60] sm:$0xff]
    %v235 = vld [vmem:[%s5 + $0x68] sm:$0xff]
    %v236 = vld [vmem:[%s5 + $0x70] sm:$0xff]
    %v237 = vld [vmem:[%s5 + $0x78] sm:$0xff]
    %v238 = vld [vmem:[%s6] sm:$0x1]
    %v240 = vlaneseq
    %v241 = vshrl.u32 %v240, 7
    %v242 = vsub.s32 0, %v241
    %v243 = vrot.slane %v238, %v242
    %245 = vmatprep.subr.mxu0 0.0
    %246 = vmatpush1.msra.mxu0 %v237
    %247 = vmatprep.subr.mxu0 0.0
    %248 = vmatpush1.msra.mxu0 %v236
    %249 = vmatprep.subr.mxu0 0.0
    %250 = vmatpush1.msra.mxu0 %v235
    %251 = vmatprep.subr.mxu0 0.0
    %252 = vmatpush1.msra.mxu0 %v234
    %253 = vmatprep.subr.mxu0 0.0
    %254 = vmatpush1.msra.mxu0 %v233
    %255 = vmatprep.subr.mxu0 0.0
    %256 = vmatpush1.msra.mxu0 %v232
    %257 = vmatprep.subr.mxu0 0.0
    %258 = vmatpush1.msra.mxu0 %v231
    %259 = vmatprep.subr.mxu0 0.0
    %260 = vmatpush1.msra.mxu0 %v230
    %261 = vmatprep.subr.mxu0 0.0
    %262 = vmatpush1.msra.mxu0 %v229
    %263 = vmatprep.subr.mxu0 0.0
    %264 = vmatpush1.msra.mxu0 %v228
    %265 = vmatprep.subr.mxu0 0.0
    %266 = vmatpush1.msra.mxu0 %v227
    %267 = vmatprep.subr.mxu0 0.0
    %268 = vmatpush1.msra.mxu0 %v226
    %269 = vmatprep.subr.mxu0 0.0
    %270 = vmatpush1.msra.mxu0 %v225
    %271 = vmatprep.subr.mxu0 0.0
    %272 = vmatpush1.msra.mxu0 %v224
    %273 = vmatprep.subr.mxu0 0.0
    %274 = vmatpush1.msra.mxu0 %v223
    %275 = vmatprep.subr.mxu0 0.0
    %276 = vmatpush1.msra.mxu0 %v222
    %277 = vmatprep.subr.mxu0 0.0
    %278 = vmatpush2.msra.mxu0 0.0
    %279 = vmatprep.subr.mxu0 0.0
    %280 = vmatpush2.msra.mxu0 0.0
    %281 = vmatprep.subr.mxu0 0.0
    %282 = vmatpush2.msra.mxu0 0.0
    %283 = vmatprep.subr.mxu0 0.0
    %284 = vmatpush2.msra.mxu0 0.0
    %285 = vmatprep.subr.mxu0 0.0
    %286 = vmatpush2.msra.mxu0 0.0
    %287 = vmatprep.subr.mxu0 0.0
    %288 = vmatpush2.msra.mxu0 0.0
    %289 = vmatprep.subr.mxu0 0.0
    %290 = vmatpush2.msra.mxu0 0.0
    %291 = vmatprep.subr.mxu0 0.0
    %292 = vmatpush2.msra.mxu0 0.0
    %293 = vmatprep.subr.mxu0 0.0
    %294 = vmatpush2.msra.mxu0 0.0
    %295 = vmatprep.subr.mxu0 0.0
    %296 = vmatpush2.msra.mxu0 0.0
    %297 = vmatprep.subr.mxu0 0.0
    %298 = vmatpush2.msra.mxu0 0.0
    %299 = vmatprep.subr.mxu0 0.0
    %300 = vmatpush2.msra.mxu0 0.0
    %301 = vmatprep.subr.mxu0 0.0
    %302 = vmatpush2.msra.mxu0 0.0
    %303 = vmatprep.subr.mxu0 0.0
    %304 = vmatpush2.msra.mxu0 0.0
    %305 = vmatprep.subr.mxu0 0.0
    %306 = vmatpush2.msra.mxu0 0.0
    %307 = vmatprep.subr.mxu0 0.0
    %308 = vmatpush2.msra.mxu0 0.0
    %309 = vmatprep.mubr.f32.mxu0 0.0
    %310 = vmatmul.mubr.f32.gmra.mxu0 %v221
    %v311 = vpop.f32.mrf.mxu0
    %v312 = vadd.f32 %v243, %v311
    %v313 = vpop.f32.mrf.mxu0
    %314 = vdwg.mxu0
    %vm315 = vcmask 130048
    %316 = vst.msk [vmem:[#allocation5] sm:$0xff] %vm315, %v312
    // Predicated region
    $region34: #{tpu_custom_call.1} parent=1 // pred_check
      _
    $region35: #{tpu_custom_call.1} parent=1 // pred_check_branch
      %318 = sbr.rel (0) target = $region37
    $region36: #{tpu_custom_call.1} parent=1 // pred_region
      %s320 = ssub.s32 128, 128
      %321 = vsyncadd [#allocation4], %s320
      %s323 = sshll.u32 [#allocation5], 4
      %s324 = int_to_ptr.vmem [resolvable:$true] %s323
      %326 = dma.vmem_to_hbm [thread:$0]  %s324, 128, %s7, [#allocation4]
    $region37: #{tpu_custom_call.1} parent=1 // pred_fallthru
      _
    // Predicated region
    $region38: #{tpu_custom_call.1} parent=1 // pred_check
      _
    $region39: #{tpu_custom_call.1} parent=1 // pred_check_branch
      %328 = sbr.rel (0) target = $region41
    $region40: #{tpu_custom_call.1} parent=1 // pred_region
      %329 = dma.done [#allocation4], 128
    $region41: #{tpu_custom_call.1} parent=1 // pred_fallthru
      _
    %330 = vsyncpa [#allocation3], 1
    %331 = vsyncpa [#allocation4], 1

// kernel: tpu_custom_call.1
$region0: #{tpu_custom_call.1}
  #allocation0 [shape = 'u32[]', space=smem, size = 0x4, offset = 0x4, fixed_abs, tag = 'smem constant byte address 0x4 - core index']
  #allocation1 [shape = 'u32[144,128]{1,0:T(1,128)}', space=vmem, size = 0x12000, scoped, tag = 'internal scratch']
  %s0 = inlined_call_operand.vmem [shape: f32[8,32], index: 0, kind: input, shape index: {}]
  %s1 = inlined_call_operand.hbm [shape: f32[32,128], index: 1, kind: input, shape index: {}]
  %s2 = inlined_call_operand.vmem [shape: f32[1,128], index: 2, kind: input, shape index: {}]
  %s3 = inlined_call_operand.vmem [shape: f32[128,128], index: 3, kind: input, shape index: {}]
  %s4 = inlined_call_operand.vmem [shape: f32[1,128], index: 4, kind: input, shape index: {}]
  %s5 = inlined_call_operand.vmem [shape: f32[128,16], index: 5, kind: input, shape index: {}]
  %s6 = inlined_call_operand.vmem [shape: f32[1,16], index: 6, kind: input, shape index: {}]
  %s7 = inlined_call_operand.hbm [shape: f32[8,16], index: 7, kind: output, shape index: {}]
  %s8 = sld [smem:[#allocation0]]
  $region42: #{tpu_custom_call.1} parent=0
    _
  %s10 = ssub.s32 1, %s8
  %s11 = scalar_select 0, %s10, %s8
  $region1: #{tpu_custom_call.1} parent=0
    #allocation2 [shape = 'u8[16384]{0}', space=vmem, size = 0x4000, scoped, tag = 'input window, operand 1, single buffered']
    #allocation3 [shape = 's32[1]{0}', space=sflag, size = 0x4, scoped, tag = 'scoped memory for tpu_custom_call.1']
    #allocation4 [shape = 's32[1]{0}', space=sflag, size = 0x4, scoped, tag = 'scoped memory for tpu_custom_call.1']
    #allocation5 [shape = 'u8[4096]{0}', space=vmem, size = 0x1000, scoped, tag = 'output window, operand 0, single buffered']
    %12 = vsyncpa [#allocation3], 0
    %13 = vsyncpa [#allocation4], 0
    // Predicated region
    $region2: #{tpu_custom_call.1} parent=1 // pred_check
      _
    $region3: #{tpu_custom_call.1} parent=1 // pred_check_branch
      %15 = sbr.rel (0) target = $region5
    $region4: #{tpu_custom_call.1} parent=1 // pred_region
      _
    $region5: #{tpu_custom_call.1} parent=1 // pred_fallthru
      _
    // Predicated region
    $region6: #{tpu_custom_call.1} parent=1 // pred_check
      _
    $region7: #{tpu_custom_call.1} parent=1 // pred_check_branch
      %17 = sbr.rel (0) target = $region9
    $region8: #{tpu_custom_call.1} parent=1 // pred_region
      %s19 = ssub.s32 512, 512
      %20 = vsyncadd [#allocation3], %s19
      %s21 = sshll.u32 [#allocation2], 4
      %s22 = int_to_ptr.vmem [resolvable:$true] %s21
      %27 = dma.hbm_to_vmem [thread:$0]  %s1, 512, %s22, [#allocation3], 128, 128, 8
    $region9: #{tpu_custom_call.1} parent=1 // pred_fallthru
      _
    // Predicated region
    $region10: #{tpu_custom_call.1} parent=1 // pred_check
      _
    $region11: #{tpu_custom_call.1} parent=1 // pred_check_branch
      %29 = sbr.rel (0) target = $region13
    $region12: #{tpu_custom_call.1} parent=1 // pred_region
      _
    $region13: #{tpu_custom_call.1} parent=1 // pred_fallthru
      _
    // Predicated region
    $region14: #{tpu_custom_call.1} parent=1 // pred_check
      _
    $region15: #{tpu_custom_call.1} parent=1 // pred_check_branch
      %31 = sbr.rel (0) target = $region17
    $region16: #{tpu_custom_call.1} parent=1 // pred_region
      _
    $region17: #{tpu_custom_call.1} parent=1 // pred_fallthru
      _
    // Predicated region
    $region18: #{tpu_custom_call.1} parent=1 // pred_check
      _
    $region19: #{tpu_custom_call.1} parent=1 // pred_check_branch
      %33 = sbr.rel (0) target = $region21
    $region20: #{tpu_custom_call.1} parent=1 // pred_region
      _
    $region21: #{tpu_custom_call.1} parent=1 // pred_fallthru
      _
    // Predicated region
    $region22: #{tpu_custom_call.1} parent=1 // pred_check
      _
    $region23: #{tpu_custom_call.1} parent=1 // pred_check_branch
      %35 = sbr.rel (0) target = $region25
    $region24: #{tpu_custom_call.1} parent=1 // pred_region
      _
    $region25: #{tpu_custom_call.1} parent=1 // pred_fallthru
      _
    // Predicated region
    $region26: #{tpu_custom_call.1} parent=1 // pred_check
      _
    $region27: #{tpu_custom_call.1} parent=1 // pred_check_branch
      %37 = sbr.rel (0) target = $region29
    $region28: #{tpu_custom_call.1} parent=1 // pred_region
      _
    $region29: #{tpu_custom_call.1} parent=1 // pred_fallthru
      _
    // Predicated region
    $region30: #{tpu_custom_call.1} parent=1 // pred_check
      _
    $region31: #{tpu_custom_call.1} parent=1 // pred_check_branch
      %39 = sbr.rel (0) target = $region33
    $region32: #{tpu_custom_call.1} parent=1 // pred_region
      %40 = dma.done [#allocation3], 512
    $region33: #{tpu_custom_call.1} parent=1 // pred_fallthru
      _
    %v41 = vld [vmem:[%s0] sm:$0xff]
    %v42 = vld [vmem:[#allocation2] sm:$0xff]
    %v43 = vld [vmem:[#allocation2 + $0x8] sm:$0xff]
    %v44 = vld [vmem:[#allocation2 + $0x10] sm:$0xff]
    %v45 = vld [vmem:[#allocation2 + $0x18] sm:$0xff]
    %v46 = vld [vmem:[%s2] sm:$0x1]
    %v48 = vlaneseq
    %v49 = vshrl.u32 %v48, 7
    %v50 = vsub.s32 0, %v49
    %v51 = vrot.slane %v46, %v50
    %vm53 = vcmask 261120
    %v55 = vsel %vm53, %v41, 0
    %57 = vmatprep.subr.mxu0 0.0
    %58 = vmatpush1.msra.mxu0 0.0
    %59 = vmatprep.subr.mxu0 0.0
    %60 = vmatpush1.msra.mxu0 0.0
    %61 = vmatprep.subr.mxu0 0.0
    %62 = vmatpush1.msra.mxu0 0.0
    %63 = vmatprep.subr.mxu0 0.0
    %64 = vmatpush1.msra.mxu0 0.0
    %65 = vmatprep.subr.mxu0 0.0
    %66 = vmatpush1.msra.mxu0 0.0
    %67 = vmatprep.subr.mxu0 0.0
    %68 = vmatpush1.msra.mxu0 0.0
    %69 = vmatprep.subr.mxu0 0.0
    %70 = vmatpush1.msra.mxu0 0.0
    %71 = vmatprep.subr.mxu0 0.0
    %72 = vmatpush1.msra.mxu0 0.0
    %73 = vmatprep.subr.mxu0 0.0
    %74 = vmatpush1.msra.mxu0 0.0
    %75 = vmatprep.subr.mxu0 0.0
    %76 = vmatpush1.msra.mxu0 0.0
    %77 = vmatprep.subr.mxu0 0.0
    %78 = vmatpush1.msra.mxu0 0.0
    %79 = vmatprep.subr.mxu0 0.0
    %80 = vmatpush1.msra.mxu0 0.0
    %81 = vmatprep.subr.mxu0 0.0
    %82 = vmatpush1.msra.mxu0 %v45
    %83 = vmatprep.subr.mxu0 0.0
    %84 = vmatpush1.msra.mxu0 %v44
    %85 = vmatprep.subr.mxu0 0.0
    %86 = vmatpush1.msra.mxu0 %v43
    %87 = vmatprep.subr.mxu0 0.0
    %88 = vmatpush1.msra.mxu0 %v42
    %89 = vmatprep.subr.mxu0 0.0
    %90 = vmatpush2.msra.mxu0 0.0
    %91 = vmatprep.subr.mxu0 0.0
    %92 = vmatpush2.msra.mxu0 0.0
    %93 = vmatprep.subr.mxu0 0.0
    %94 = vmatpush2.msra.mxu0 0.0
    %95 = vmatprep.subr.mxu0 0.0
    %96 = vmatpush2.msra.mxu0 0.0
    %97 = vmatprep.subr.mxu0 0.0
    %98 = vmatpush2.msra.mxu0 0.0
    %99 = vmatprep.subr.mxu0 0.0
    %100 = vmatpush2.msra.mxu0 0.0
    %101 = vmatprep.subr.mxu0 0.0
    %102 = vmatpush2.msra.mxu0 0.0
    %103 = vmatprep.subr.mxu0 0.0
    %104 = vmatpush2.msra.mxu0 0.0
    %105 = vmatprep.subr.mxu0 0.0
    %106 = vmatpush2.msra.mxu0 0.0
    %107 = vmatprep.subr.mxu0 0.0
    %108 = vmatpush2.msra.mxu0 0.0
    %109 = vmatprep.subr.mxu0 0.0
    %110 = vmatpush2.msra.mxu0 0.0
    %111 = vmatprep.subr.mxu0 0.0
    %112 = vmatpush2.msra.mxu0 0.0
    %113 = vmatprep.subr.mxu0 0.0
    %114 = vmatpush2.msra.mxu0 0.0
    %115 = vmatprep.subr.mxu0 0.0
    %116 = vmatpush2.msra.mxu0 0.0
    %117 = vmatprep.subr.mxu0 0.0
    %118 = vmatpush2.msra.mxu0 0.0
    %119 = vmatprep.subr.mxu0 0.0
    %120 = vmatpush2.msra.mxu0 0.0
    %121 = vmatprep.mubr.f32.mxu0 0.0
    %122 = vmatmul.mubr.f32.gmra.mxu0 %v55
    %v123 = vpop.f32.mrf.mxu0
    %v124 = vadd.f32 %v51, %v123
    %v125 = vpop.f32.mrf.mxu0
    %126 = vdwg.mxu0
    %v127 = vmax.f32 %v124, 0.0
    %v128 = vld [vmem:[%s3] sm:$0xff]
    %v129 = vld [vmem:[%s3 + $0x8] sm:$0xff]
    %v130 = vld [vmem:[%s3 + $0x10] sm:$0xff]
    %v131 = vld [vmem:[%s3 + $0x18] sm:$0xff]
    %v132 = vld [vmem:[%s3 + $0x20] sm:$0xff]
    %v133 = vld [vmem:[%s3 + $0x28] sm:$0xff]
    %v134 = vld [vmem:[%s3 + $0x30] sm:$0xff]
    %v135 = vld [vmem:[%s3 + $0x38] sm:$0xff]
    %v136 = vld [vmem:[%s3 + $0x40] sm:$0xff]
    %v137 = vld [vmem:[%s3 + $0x48] sm:$0xff]
    %v138 = vld [vmem:[%s3 + $0x50] sm:$0xff]
    %v139 = vld [vmem:[%s3 + $0x58] sm:$0xff]
    %v140 = vld [vmem:[%s3 + $0x60] sm:$0xff]
    %v141 = vld [vmem:[%s3 + $0x68] sm:$0xff]
    %v142 = vld [vmem:[%s3 + $0x70] sm:$0xff]
    %v143 = vld [vmem:[%s3 + $0x78] sm:$0xff]
    %v144 = vld [vmem:[%s4] sm:$0x1]
    %v146 = vlaneseq
    %v147 = vshrl.u32 %v146, 7
    %v148 = vsub.s32 0, %v147
    %v149 = vrot.slane %v144, %v148
    %151 = vmatprep.subr.mxu0 0.0
    %152 = vmatpush1.msra.mxu0 %v143
    %153 = vmatprep.subr.mxu0 0.0
    %154 = vmatpush1.msra.mxu0 %v142
    %155 = vmatprep.subr.mxu0 0.0
    %156 = vmatpush1.msra.mxu0 %v141
    %157 = vmatprep.subr.mxu0 0.0
    %158 = vmatpush1.msra.mxu0 %v140
    %159 = vmatprep.subr.mxu0 0.0
    %160 = vmatpush1.msra.mxu0 %v139
    %161 = vmatprep.subr.mxu0 0.0
    %162 = vmatpush1.msra.mxu0 %v138
    %163 = vmatprep.subr.mxu0 0.0
    %164 = vmatpush1.msra.mxu0 %v137
    %165 = vmatprep.subr.mxu0 0.0
    %166 = vmatpush1.msra.mxu0 %v136
    %167 = vmatprep.subr.mxu0 0.0
    %168 = vmatpush1.msra.mxu0 %v135
    %169 = vmatprep.subr.mxu0 0.0
    %170 = vmatpush1.msra.mxu0 %v134
    %171 = vmatprep.subr.mxu0 0.0
    %172 = vmatpush1.msra.mxu0 %v133
    %173 = vmatprep.subr.mxu0 0.0
    %174 = vmatpush1.msra.mxu0 %v132
    %175 = vmatprep.subr.mxu0 0.0
    %176 = vmatpush1.msra.mxu0 %v131
    %177 = vmatprep.subr.mxu0 0.0
    %178 = vmatpush1.msra.mxu0 %v130
    %179 = vmatprep.subr.mxu0 0.0
    %180 = vmatpush1.msra.mxu0 %v129
    %181 = vmatprep.subr.mxu0 0.0
    %182 = vmatpush1.msra.mxu0 %v128
    %183 = vmatprep.subr.mxu0 0.0
    %184 = vmatpush2.msra.mxu0 0.0
    %185 = vmatprep.subr.mxu0 0.0
    %186 = vmatpush2.msra.mxu0 0.0
    %187 = vmatprep.subr.mxu0 0.0
    %188 = vmatpush2.msra.mxu0 0.0
    %189 = vmatprep.subr.mxu0 0.0
    %190 = vmatpush2.msra.mxu0 0.0
    %191 = vmatprep.subr.mxu0 0.0
    %192 = vmatpush2.msra.mxu0 0.0
    %193 = vmatprep.subr.mxu0 0.0
    %194 = vmatpush2.msra.mxu0 0.0
    %195 = vmatprep.subr.mxu0 0.0
    %196 = vmatpush2.msra.mxu0 0.0
    %197 = vmatprep.subr.mxu0 0.0
    %198 = vmatpush2.msra.mxu0 0.0
    %199 = vmatprep.subr.mxu0 0.0
    %200 = vmatpush2.msra.mxu0 0.0
    %201 = vmatprep.subr.mxu0 0.0
    %202 = vmatpush2.msra.mxu0 0.0
    %203 = vmatprep.subr.mxu0 0.0
    %204 = vmatpush2.msra.mxu0 0.0
    %205 = vmatprep.subr.mxu0 0.0
    %206 = vmatpush2.msra.mxu0 0.0
    %207 = vmatprep.subr.mxu0 0.0
    %208 = vmatpush2.msra.mxu0 0.0
    %209 = vmatprep.subr.mxu0 0.0
    %210 = vmatpush2.msra.mxu0 0.0
    %211 = vmatprep.subr.mxu0 0.0
    %212 = vmatpush2.msra.mxu0 0.0
    %213 = vmatprep.subr.mxu0 0.0
    %214 = vmatpush2.msra.mxu0 0.0
    %215 = vmatprep.mubr.f32.mxu0 0.0
    %216 = vmatmul.mubr.f32.gmra.mxu0 %v127
    %v217 = vpop.f32.mrf.mxu0
    %v218 = vadd.f32 %v149, %v217
    %v219 = vpop.f32.mrf.mxu0
    %220 = vdwg.mxu0
    %v221 = vmax.f32 %v218, 0.0
    %v222 = vld [vmem:[%s5] sm:$0xff]
    %v223 = vld [vmem:[%s5 + $0x8] sm:$0xff]
    %v224 = vld [vmem:[%s5 + $0x10] sm:$0xff]
    %v225 = vld [vmem:[%s5 + $0x18] sm:$0xff]
    %v226 = vld [vmem:[%s5 + $0x20] sm:$0xff]
    %v227 = vld [vmem:[%s5 + $0x28] sm:$0xff]
    %v228 = vld [vmem:[%s5 + $0x30] sm:$0xff]
    %v229 = vld [vmem:[%s5 + $0x38] sm:$0xff]
    %v230 = vld [vmem:[%s5 + $0x40] sm:$0xff]
    %v231 = vld [vmem:[%s5 + $0x48] sm:$0xff]
    %v232 = vld [vmem:[%s5 + $0x50] sm:$0xff]
    %v233 = vld [vmem:[%s5 + $0x58] sm:$0xff]
    %v234 = vld [vmem:[%s5 + $0x60] sm:$0xff]
    %v235 = vld [vmem:[%s5 + $0x68] sm:$0xff]
    %v236 = vld [vmem:[%s5 + $0x70] sm:$0xff]
    %v237 = vld [vmem:[%s5 + $0x78] sm:$0xff]
    %v238 = vld [vmem:[%s6] sm:$0x1]
    %v240 = vlaneseq
    %v241 = vshrl.u32 %v240, 7
    %v242 = vsub.s32 0, %v241
    %v243 = vrot.slane %v238, %v242
    %245 = vmatprep.subr.mxu0 0.0
    %246 = vmatpush1.msra.mxu0 %v237
    %247 = vmatprep.subr.mxu0 0.0
    %248 = vmatpush1.msra.mxu0 %v236
    %249 = vmatprep.subr.mxu0 0.0
    %250 = vmatpush1.msra.mxu0 %v235
    %251 = vmatprep.subr.mxu0 0.0
    %252 = vmatpush1.msra.mxu0 %v234
    %253 = vmatprep.subr.mxu0 0.0
    %254 = vmatpush1.msra.mxu0 %v233
    %255 = vmatprep.subr.mxu0 0.0
    %256 = vmatpush1.msra.mxu0 %v232
    %257 = vmatprep.subr.mxu0 0.0
    %258 = vmatpush1.msra.mxu0 %v231
    %259 = vmatprep.subr.mxu0 0.0
    %260 = vmatpush1.msra.mxu0 %v230
    %261 = vmatprep.subr.mxu0 0.0
    %262 = vmatpush1.msra.mxu0 %v229
    %263 = vmatprep.subr.mxu0 0.0
    %264 = vmatpush1.msra.mxu0 %v228
    %265 = vmatprep.subr.mxu0 0.0
    %266 = vmatpush1.msra.mxu0 %v227
    %267 = vmatprep.subr.mxu0 0.0
    %268 = vmatpush1.msra.mxu0 %v226
    %269 = vmatprep.subr.mxu0 0.0
    %270 = vmatpush1.msra.mxu0 %v225
    %271 = vmatprep.subr.mxu0 0.0
    %272 = vmatpush1.msra.mxu0 %v224
    %273 = vmatprep.subr.mxu0 0.0
    %274 = vmatpush1.msra.mxu0 %v223
    %275 = vmatprep.subr.mxu0 0.0
    %276 = vmatpush1.msra.mxu0 %v222
    %277 = vmatprep.subr.mxu0 0.0
    %278 = vmatpush2.msra.mxu0 0.0
    %279 = vmatprep.subr.mxu0 0.0
    %280 = vmatpush2.msra.mxu0 0.0
    %281 = vmatprep.subr.mxu0 0.0
    %282 = vmatpush2.msra.mxu0 0.0
    %283 = vmatprep.subr.mxu0 0.0
    %284 = vmatpush2.msra.mxu0 0.0
    %285 = vmatprep.subr.mxu0 0.0
    %286 = vmatpush2.msra.mxu0 0.0
    %287 = vmatprep.subr.mxu0 0.0
    %288 = vmatpush2.msra.mxu0 0.0
    %289 = vmatprep.subr.mxu0 0.0
    %290 = vmatpush2.msra.mxu0 0.0
    %291 = vmatprep.subr.mxu0 0.0
    %292 = vmatpush2.msra.mxu0 0.0
    %293 = vmatprep.subr.mxu0 0.0
    %294 = vmatpush2.msra.mxu0 0.0
    %295 = vmatprep.subr.mxu0 0.0
    %296 = vmatpush2.msra.mxu0 0.0
    %297 = vmatprep.subr.mxu0 0.0
    %298 = vmatpush2.msra.mxu0 0.0
    %299 = vmatprep.subr.mxu0 0.0
    %300 = vmatpush2.msra.mxu0 0.0
    %301 = vmatprep.subr.mxu0 0.0
    %302 = vmatpush2.msra.mxu0 0.0
    %303 = vmatprep.subr.mxu0 0.0
    %304 = vmatpush2.msra.mxu0 0.0
    %305 = vmatprep.subr.mxu0 0.0
    %306 = vmatpush2.msra.mxu0 0.0
    %307 = vmatprep.subr.mxu0 0.0
    %308 = vmatpush2.msra.mxu0 0.0
    %309 = vmatprep.mubr.f32.mxu0 0.0
    %310 = vmatmul.mubr.f32.gmra.mxu0 %v221
    %v311 = vpop.f32.mrf.mxu0
    %v312 = vadd.f32 %v243, %v311
    %v313 = vpop.f32.mrf.mxu0
    %314 = vdwg.mxu0
    %vm315 = vcmask 130048
    %316 = vst.msk [vmem:[#allocation5] sm:$0xff] %vm315, %v312
    // Predicated region
    $region34: #{tpu_custom_call.1} parent=1 // pred_check
      _
    $region35: #{tpu_custom_call.1} parent=1 // pred_check_branch
      %318 = sbr.rel (0) target = $region37
    $region36: #{tpu_custom_call.1} parent=1 // pred_region
      %s320 = ssub.s32 128, 128
      %321 = vsyncadd [#allocation4], %s320
      %s323 = sshll.u32 [#allocation5], 4
      %s324 = int_to_ptr.vmem [resolvable:$true] %s323
      %326 = dma.vmem_to_hbm [thread:$0]  %s324, 128, %s7, [#allocation4]
    $region37: #{tpu_custom_call.1} parent=1 // pred_fallthru
      _
    // Predicated region
    $region38: #{tpu_custom_call.1} parent=1 // pred_check
      _
    $region39: #{tpu_custom_call.1} parent=1 // pred_check_branch
      %328 = sbr.rel (0) target = $region41
    $region40: #{tpu_custom_call.1} parent=1 // pred_region
      %329 = dma.done [#allocation4], 128
    $region41: #{tpu_custom_call.1} parent=1 // pred_fallthru
      _
    %330 = vsyncpa [#allocation3], 1
    %331 = vsyncpa [#allocation4], 1

</llo_original>
